<compile_context>
chip_gen: v5e
topology: v5e:2x2
jax: 0.10.0
libtpu: 0.0.40
codegen_flags: <defaults>
</compile_context>

<pallas_src>
import jax
import jax.numpy as jnp
from jax.experimental import pallas as pl
from jax.experimental.pallas import tpu as pltpu

_LANE = 128      # lane width (last-dim alignment)
_SUBLANE = 8     # f32 sublane alignment (second-to-last dim)
_MIN_ROWS_FOR_PALLAS = 1024   # below this, XLA's fused dot wins on launch/DMA overhead


def _round_up(x: int, m: int) -> int:
    return (x + m - 1) // m * m


def _vmem_capacity_bytes() -> int:
    """Per-core VMEM capacity; conservative fallback if the query fails."""
    try:
        cap = int(pltpu.get_tpu_info().vmem_capacity_bytes)
        if cap > 0:
            return cap
    except Exception:
        pass
    return 64 * 1024 * 1024   # v7x per-TC capacity (smallest of v5e/v6e/v7x)


def _resident_spec(block_shape, index_map, single_buffer):
    """BlockSpec for weight/bias. When the block index is constant across the
    whole grid, request a single buffer (no pointless double-buffer copy);
    fall back silently if pipeline_mode/Buffered is unavailable."""
    if single_buffer:
        try:
            return pl.BlockSpec(block_shape, index_map,
                                pipeline_mode=pl.Buffered(1))
        except Exception:
            pass
    return pl.BlockSpec(block_shape, index_map)


def _linear_kernel(x_ref, w_ref, b_ref, o_ref):
    # x_ref: (tm, K) in the I/O dtype; w_ref: (K, tn) in the compute dtype
    # (bf16); b_ref: (1, tn) f32; o_ref: (tm, tn) in the I/O dtype.
    # bf16 operands -> single MXU pass; f32 accumulation; f32 bias add.
    x = x_ref[...].astype(w_ref.dtype)
    acc = jnp.dot(x, w_ref[...], preferred_element_type=jnp.float32)
    o_ref[...] = (acc + b_ref[...]).astype(o_ref.dtype)


def _pallas_linear(x2d, w_pad, b_pad, n_out, *, tm_max=1024):
    """y = x2d @ w_pad + b_pad (padded columns sliced off).

    x2d:   (M, K)   activations (f32 or bf16), streamed in M tiles.
    w_pad: (K, Np)  weight, pre-padded to Np = round_up(n_out, 128), bf16.
    b_pad: (1, Np)  bias, pre-padded, f32.
    """
    M, K = x2d.shape
    Kw, Np = w_pad.shape
    assert K == Kw, (K, Kw)
    out_dtype = x2d.dtype
    x_sz = jnp.dtype(x2d.dtype).itemsize
    w_sz = jnp.dtype(w_pad.dtype).itemsize
    o_sz = jnp.dtype(out_dtype).itemsize

    vmem_cap = _vmem_capacity_bytes()
    # ~half of physical VMEM as working budget (64 MiB on v5e/v6e, 32 MiB on v7x).
    budget = max(16 * 1024 * 1024, min(vmem_cap // 2, 96 * 1024 * 1024))
    # Tell the compiler about it (default scoped VMEM is only 16/32 MiB).
    vmem_limit = min(vmem_cap * 3 // 4, 128 * 1024 * 1024)

    def footprint(tm, tn):
        # Conservative: count double-buffering for every block (even the
        # resident weight/bias, in case Buffered(1) is unavailable).
        return (2 * tm * K * x_sz        # streamed x tiles
                + 2 * tm * tn * o_sz     # streamed out tiles
                + 2 * K * tn * w_sz      # weight block(s)
                + 2 * tn * 4)            # f32 bias block(s)

    # 1) Pick tn: keep the whole (lane-dense) N if the weight fits, otherwise
    #    tile N so arbitrarily large weights still fit VMEM.
    tn = Np
    while tn > _LANE and footprint(_SUBLANE, tn) > budget:
        tn = _round_up(tn // 2, _LANE)

    # 2) Pick tm: as large as the budget allows, multiple of 8 (256 when big).
    tm = min(_round_up(M, _SUBLANE), _round_up(tm_max, _SUBLANE))
    if tm >= 256:
        tm = (tm // 256) * 256
    while tm > _SUBLANE and footprint(tm, tn) > budget:
        tm = max(_SUBLANE, _round_up(tm // 2, _SUBLANE))
    # 3) Make sure the parallel M axis has >= 2 steps so both v7x TCs get work.
    while tm > _SUBLANE and pl.cdiv(M, tm) < 2:
        tm = max(_SUBLANE, _round_up(tm // 2, _SUBLANE))

    n_tiles_n = pl.cdiv(Np, tn)
    n_tiles_m = pl.cdiv(M, tm)
    grid = (n_tiles_n, n_tiles_m)   # M is the fast axis: x streams, weight stays put

    cost = pl.CostEstimate(
        flops=2 * M * K * Np,
        transcendentals=0,
        bytes_accessed=(n_tiles_n * M * K * x_sz   # x re-read per N tile
                        + K * Np * w_sz + Np * 4 + M * Np * o_sz),
    )

    single_buffer = n_tiles_n == 1   # weight/bias block index constant -> 1 buffer

    out = pl.pallas_call(
        _linear_kernel,
        out_shape=jax.ShapeDtypeStruct((M, Np), out_dtype),
        grid=grid,
        in_specs=[
            pl.BlockSpec((tm, K), lambda j, i: (i, 0)),              # streamed x
            _resident_spec((K, tn), lambda j, i: (0, j), single_buffer),  # weight
            _resident_spec((1, tn), lambda j, i: (0, j), single_buffer),  # bias
        ],
        out_specs=pl.BlockSpec((tm, tn), lambda j, i: (i, j)),
        compiler_params=pltpu.CompilerParams(
            dimension_semantics=("parallel", "parallel"),
            vmem_limit_bytes=vmem_limit,
        ),
        cost_estimate=cost,
    )(x2d, w_pad, b_pad)

    return out if Np == n_out else out[:, :n_out]


class Conditioner:
    """JAX/Pallas port of the Conditioner base class."""

    def __init__(self, dim: int, output_dim: int, project_out: bool = False,
                 key=None, compute_dtype=jnp.bfloat16):
        self.dim = dim
        self.output_dim = output_dim
        self.has_proj = (dim != output_dim) or project_out
        if self.has_proj:
            if key is None:
                key = jax.random.PRNGKey(0)
            kw, kb = jax.random.split(key)
            # nn.Linear init: uniform(-1/sqrt(dim), 1/sqrt(dim)).  PyTorch stores
            # weight as (output_dim, dim); we keep the transposed (dim, output_dim).
            bound = 1.0 / (dim ** 0.5)
            self.weight_t = jax.random.uniform(
                kw, (dim, output_dim), jnp.float32, -bound, bound)
            self.bias = jax.random.uniform(
                kb, (output_dim,), jnp.float32, -bound, bound)
            # Pre-pad (lane-dense Np) and pre-cast ONCE for the kernel.
            # Compute dtype is an explicit choice (bf16 MXU operands, f32
            # accumulation), not inherited from the activation dtype.
            np_ = _round_up(output_dim, _LANE)
            self._np = np_
            self._w_kernel = jnp.pad(
                self.weight_t, ((0, 0), (0, np_ - output_dim))).astype(compute_dtype)
            self._b_kernel = jnp.pad(
                self.bias, (0, np_ - output_dim)).reshape(1, np_).astype(jnp.float32)
        else:
            self.weight_t = None
            self.bias = None
            self._w_kernel = None
            self._b_kernel = None

    def proj(self, x, use_pallas=None):
        """Apply self.proj_out (the only concrete compute in the module)."""
        if not self.has_proj:
            return x  # nn.Identity()
        B, T, D = x.shape
        x2d = x.reshape(B * T, D)
        M = B * T
        if use_pallas is None:
            # Tiny problems: custom-call launch + DMA overhead dominates.
            use_pallas = M >= _MIN_ROWS_FOR_PALLAS
        if use_pallas and M >= _SUBLANE:
            y2d = _pallas_linear(x2d, self._w_kernel, self._b_kernel,
                                 self.output_dim)
        else:
            y2d = x2d @ self.weight_t + self.bias
        return y2d.reshape(B, T, self.output_dim)

    def forward(self, x):
        # Matches the PyTorch base class exactly: abstract method.
        raise NotImplementedError()
        # TODO(synk): subclasses define forward(); the base class only supplies proj_out.


if __name__ == "__main__":
    key = jax.random.PRNGKey(0)
    k_x, k_x2, k_p = jax.random.split(key, 3)

    B, T, dim, output_dim = 2, 8, 32, 64
    x = jax.random.normal(k_x, (B, T, dim), jnp.float32)

    cond = Conditioner(dim=dim, output_dim=output_dim, project_out=False, key=k_p)

    def ref_proj(xx):
        # Reference with the same bf16 operand rounding the kernel uses
        # (f32 accumulation), so the comparison is tight.
        x_bf = xx.reshape(-1, dim).astype(jnp.bfloat16).astype(jnp.float32)
        w_bf = cond.weight_t.astype(jnp.bfloat16).astype(jnp.float32)
        return (x_bf @ w_bf + cond.bias).reshape(xx.shape[0], xx.shape[1], output_dim)

    # Force the Pallas path at the small demo size so the kernel is exercised
    # (single N tile, two M tiles, lane-padded output).
    y = cond.proj(x, use_pallas=True)
    y = jax.block_until_ready(y)
    assert y.shape == (B, T, output_dim)
    assert jnp.allclose(y, ref_proj(x), atol=2e-3, rtol=2e-3)
    # Loose sanity check against the pure-f32 reference as well.
    y_f32 = (x.reshape(-1, dim) @ cond.weight_t + cond.bias).reshape(B, T, output_dim)
    assert jnp.allclose(y, y_f32, atol=5e-2, rtol=5e-2)

    # Second check: multi-tile grid with a ragged last M block (M = 600 rows,
    # no wrapper-side padding of M).
    B2, T2 = 2, 300
    x2 = jax.random.normal(k_x2, (B2, T2, dim), jnp.float32)
    y2 = cond.proj(x2, use_pallas=True)
    y2 = jax.block_until_ready(y2)
    assert y2.shape == (B2, T2, output_dim)
    assert jnp.allclose(y2, ref_proj(x2), atol=2e-3, rtol=2e-3)

    print("KERNEL_OK")
</pallas_src>

<mosaic_0001>
module attributes {stable_mosaic.version = 11 : i64} {
  func.func @_linear_kernel(%arg0: i32, %arg1: i32, %arg2: memref<8x32xf32, #tpu.memory_space<vmem>>, %arg3: memref<32x128xbf16, #tpu.memory_space<vmem>>, %arg4: memref<1x128xf32, #tpu.memory_space<vmem>>, %arg5: memref<8x128xf32, #tpu.memory_space<vmem>>) attributes {dimension_semantics = [#tpu.dimension_semantics<parallel>, #tpu.dimension_semantics<parallel>], iteration_bounds = array<i64: 1, 2>, scalar_prefetch = 0 : i64, scratch_operands = 0 : i64, tpu.core_type = #tpu.core_type<tc>, window_params = [{transform_indices = @transform_0, window_bounds = array<i64: 8, 32>}, {pipeline_mode = #tpu.pipeline_mode<synchronous>, transform_indices = @transform_1, window_bounds = array<i64: 32, 128>}, {pipeline_mode = #tpu.pipeline_mode<synchronous>, transform_indices = @transform_2, window_bounds = array<i64: 1, 128>}, {transform_indices = @transform_3, window_bounds = array<i64: 8, 128>}]} {
    %c0 = arith.constant 0 : index
    %c0_0 = arith.constant 0 : index
    %0 = vector.load %arg2[%c0, %c0_0] : memref<8x32xf32, #tpu.memory_space<vmem>>, vector<8x32xf32>
    %1 = arith.truncf %0 : vector<8x32xf32> to vector<8x32xbf16>
    %c0_1 = arith.constant 0 : index
    %c0_2 = arith.constant 0 : index
    %2 = vector.load %arg3[%c0_1, %c0_2] : memref<32x128xbf16, #tpu.memory_space<vmem>>, vector<32x128xbf16>
    %cst = arith.constant dense<0.000000e+00> : vector<8x128xf32>
    %3 = tpu.matmul %1, %2, %cst {dimension_numbers = #tpu.dot_dimension_numbers<[1], [0], [0], [1], [0, 0, 1, 1], [], []>} : vector<8x32xbf16>, vector<32x128xbf16>, vector<8x128xf32> -> vector<8x128xf32>
    %c0_3 = arith.constant 0 : index
    %c0_4 = arith.constant 0 : index
    %4 = vector.load %arg4[%c0_3, %c0_4] : memref<1x128xf32, #tpu.memory_space<vmem>>, vector<1x128xf32>
    %5 = vector.broadcast %4 : vector<1x128xf32> to vector<8x128xf32>
    %6 = arith.addf %3, %5 : vector<8x128xf32>
    %c0_5 = arith.constant 0 : index
    %c0_6 = arith.constant 0 : index
    %7 = vector.load %arg5[%c0_5, %c0_6] : memref<8x128xf32, #tpu.memory_space<vmem>>, vector<8x128xf32>
    tpu.vector_store %arg5[%c0_5, %c0_6], %6 {strides = array<i32>} : memref<8x128xf32, #tpu.memory_space<vmem>>, vector<8x128xf32>,
    return
  }
  func.func @transform_0(%arg0: i32, %arg1: i32) -> (i32, i32) {
    %c0_i32 = arith.constant 0 : i32
    %c0_i32_0 = arith.constant 0 : i32
    return %arg1, %c0_i32 : i32, i32
  }
  func.func @transform_1(%arg0: i32, %arg1: i32) -> (i32, i32) {
    %c0_i32 = arith.constant 0 : i32
    %c0_i32_0 = arith.constant 0 : i32
    return %c0_i32, %arg0 : i32, i32
  }
  func.func @transform_2(%arg0: i32, %arg1: i32) -> (i32, i32) {
    %c0_i32 = arith.constant 0 : i32
    %c0_i32_0 = arith.constant 0 : i32
    return %c0_i32, %arg0 : i32, i32
  }
  func.func @transform_3(%arg0: i32, %arg1: i32) -> (i32, i32) {
    %c0_i32 = arith.constant 0 : i32
    return %arg1, %arg0 : i32, i32
  }
}

</mosaic_0001>

<llo_original>
// kernel: tpu_custom_call.1
$region0: #{tpu_custom_call.1}
  #allocation0 [shape = 'u32[]', space=smem, size = 0x4, offset = 0x4, fixed_abs, tag = 'smem constant byte address 0x4 - core index']
  #allocation1 [shape = 'u32[72,128]{1,0:T(1,128)}', space=vmem, size = 0x9000, scoped, tag = 'internal scratch']
  %s0 = inlined_call_operand.hbm [shape: f32[16,32], index: 0, kind: input, shape index: {}]
  %s1 = inlined_call_operand.hbm [shape: bf16[32,128], index: 1, kind: input, shape index: {}]
  %s2 = inlined_call_operand.vmem [shape: f32[1,128], index: 2, kind: input, shape index: {}]
  %s3 = inlined_call_operand.hbm [shape: f32[16,128], index: 3, kind: output, shape index: {}]
  %s4 = sld [smem:[#allocation0]]
  $region53: #{tpu_custom_call.1} parent=0
    _
  %s6 = ssub.s32 1, %s4
  %s7 = scalar_select 0, %s6, %s4
  $region1: #{tpu_custom_call.1} parent=0
    #allocation2 [shape = 'u8[8192]{0}', space=vmem, size = 0x2000, scoped, tag = 'input window, operand 0']
    #allocation3 [shape = 's32[2]{0}', space=sflag, size = 0x8, scoped, tag = 'scoped memory for tpu_custom_call.1']
    #allocation4 [shape = 's32[2]{0}', space=sflag, size = 0x8, scoped, tag = 'scoped memory for tpu_custom_call.1']
    #allocation5 [shape = 'u8[8192]{0}', space=vmem, size = 0x2000, scoped, tag = 'input window, operand 1, single buffered']
    #allocation6 [shape = 's32[1]{0}', space=sflag, size = 0x4, scoped, tag = 'scoped memory for tpu_custom_call.1']
    #allocation7 [shape = 'u8[8192]{0}', space=vmem, size = 0x2000, scoped, tag = 'output window, operand 0']
    %8 = vsyncpa [#allocation3], 0
    %s9 = scalar_lea.sflag [#allocation3], 1
    %10 = vsyncpa %s9, 0
    %11 = vsyncpa [#allocation6], 0
    %12 = vsyncpa [#allocation4], 0
    %s13 = scalar_lea.sflag [#allocation4], 1
    %14 = vsyncpa %s13, 0
    loop: start=0, step=1, limit=4
    $region2: #{tpu_custom_call.1} parent=1 // loop_pre_header
      _
    $region3: #{tpu_custom_call.1} parent=1 // loop_header
      %s16 = sphi 0, %s20
      %p17 = scmp.ge.s32.totalorder %s16, 4
      %s23 = sphi 0, %s35
      %s24 = sphi 0, %s31
      %s25 = sphi 0, %s23
      %s26 = sphi 0, %s24
      %s27 = sphi 0, %s25
      %s28 = sphi 0, %s26
      %s38 = sphi 0, %s40
      %s41 = sphi 0, %s38
      %s42 = sphi 0, %s41
      %s58 = sphi 0, %s42
      %s64 = sphi 0, %s66
      %s67 = sphi 0, %s64
      %s68 = sphi 0, %s67
      %s84 = sphi 0, %s68
      %s90 = sphi 0, %s92
      %s93 = sphi 0, %s90
      %s94 = sphi 0, %s93
      %s110 = sphi 0, %s94
      %s118 = sphi 0, %s120
      %s121 = sphi 0, %s118
      %s122 = sphi 0, %s121
      %s138 = sphi 0, %s122
    $region4: #{tpu_custom_call.1} parent=1 // loop_header_branch
      %19 = sbr.rel (%p17) target = $region8
    $region5: #{tpu_custom_call.1} parent=1 // loop_body
      %s21 = ssub.s32 %s16, 1
      %s22 = ssub.s32 %s16, 2
      %s29 = sadd.s32 1, %s24
      %p30 = scmp.ge.s32.totalorder %s29, 2
      %s31 = scalar_select %p30, 0, %s29
      %s32 = sadd.s32 1, %s23
      %s33 = scalar_select %p30, %s32, %s23
      %p34 = scmp.ge.s32.totalorder %s33, 1
      %s35 = scalar_select %p34, 0, %s33
      %s36 = ssub.s32 %s24, %s31
      %p37 = scmp.eq.s32.totalorder %s36, 0
      %s39 = sadd.s32 %s38, 1
      %s40 = scalar_select %p37, %s38, %s39
      %p43 = pneg %p37
      %p44 = scmp.eq.s32.totalorder %s16, 1
      %p45 = por %p43, %p44
      %p46 = scmp.ne.s32.totalorder %s38, %s41
      %p47 = scmp.eq.s32.totalorder %s16, 0
      %p48 = por %p46, %p47
      %p49 = scmp.ne.s32.totalorder %s38, %s41
      %p50 = scmp.eq.s32.totalorder %s21, 1
      %p51 = por %p49, %p50
      %p52 = scmp.ne.s32.totalorder %s41, %s42
      %p53 = scmp.eq.s32.totalorder %s21, 0
      %p54 = por %p52, %p53
      %p55 = scmp.ne.s32.totalorder %s41, %s42
      %p56 = scmp.eq.s32.totalorder %s22, 1
      %p57 = por %p55, %p56
      %p59 = scmp.ne.s32.totalorder %s42, %s58
      %p60 = scmp.eq.s32.totalorder %s22, 0
      %p61 = por %p59, %p60
      %s62 = ssub.s32 %s23, %s35
      %p63 = scmp.eq.s32.totalorder %s62, 0
      %s65 = sadd.s32 %s64, 1
      %s66 = scalar_select %p63, %s64, %s65
      %p69 = pneg %p63
      %p70 = scmp.eq.s32.totalorder %s16, 1
      %p71 = por %p69, %p70
      %p72 = scmp.ne.s32.totalorder %s64, %s67
      %p73 = scmp.eq.s32.totalorder %s16, 0
      %p74 = por %p72, %p73
      %p75 = scmp.ne.s32.totalorder %s64, %s67
      %p76 = scmp.eq.s32.totalorder %s21, 1
      %p77 = por %p75, %p76
      %p78 = scmp.ne.s32.totalorder %s67, %s68
      %p79 = scmp.eq.s32.totalorder %s21, 0
      %p80 = por %p78, %p79
      %p81 = scmp.ne.s32.totalorder %s67, %s68
      %p82 = scmp.eq.s32.totalorder %s22, 1
      %p83 = por %p81, %p82
      %p85 = scmp.ne.s32.totalorder %s68, %s84
      %p86 = scmp.eq.s32.totalorder %s22, 0
      %p87 = por %p85, %p86
      %s88 = ssub.s32 %s23, %s35
      %p89 = scmp.eq.s32.totalorder %s88, 0
      %s91 = sadd.s32 %s90, 1
      %s92 = scalar_select %p89, %s90, %s91
      %p95 = pneg %p89
      %p96 = scmp.eq.s32.totalorder %s16, 1
      %p97 = por %p95, %p96
      %p98 = scmp.ne.s32.totalorder %s90, %s93
      %p99 = scmp.eq.s32.totalorder %s16, 0
      %p100 = por %p98, %p99
      %p101 = scmp.ne.s32.totalorder %s90, %s93
      %p102 = scmp.eq.s32.totalorder %s21, 1
      %p103 = por %p101, %p102
      %p104 = scmp.ne.s32.totalorder %s93, %s94
      %p105 = scmp.eq.s32.totalorder %s21, 0
      %p106 = por %p104, %p105
      %p107 = scmp.ne.s32.totalorder %s93, %s94
      %p108 = scmp.eq.s32.totalorder %s22, 1
      %p109 = por %p107, %p108
      %p111 = scmp.ne.s32.totalorder %s94, %s110
      %p112 = scmp.eq.s32.totalorder %s22, 0
      %p113 = por %p111, %p112
      %s114 = ssub.s32 %s24, %s31
      %s115 = ssub.s32 %s23, %s35
      %s116 = sor.u32 %s114, %s115
      %p117 = scmp.eq.s32.totalorder %s116, 0
      %s119 = sadd.s32 %s118, 1
      %s120 = scalar_select %p117, %s118, %s119
      %p123 = pneg %p117
      %p124 = scmp.eq.s32.totalorder %s16, 1
      %p125 = por %p123, %p124
      %p126 = scmp.ne.s32.totalorder %s118, %s121
      %p127 = scmp.eq.s32.totalorder %s16, 0
      %p128 = por %p126, %p127
      %p129 = scmp.ne.s32.totalorder %s118, %s121
      %p130 = scmp.eq.s32.totalorder %s21, 1
      %p131 = por %p129, %p130
      %p132 = scmp.ne.s32.totalorder %s121, %s122
      %p133 = scmp.eq.s32.totalorder %s21, 0
      %p134 = por %p132, %p133
      %p135 = scmp.ne.s32.totalorder %s121, %s122
      %p136 = scmp.eq.s32.totalorder %s22, 1
      %p137 = por %p135, %p136
      %p139 = scmp.ne.s32.totalorder %s122, %s138
      %p140 = scmp.eq.s32.totalorder %s22, 0
      %p141 = por %p139, %p140
      %p142 = scmp.le.s32.totalorder 1, %s16
      %p143 = scmp.lt.s32.totalorder %s16, 3
      %p144 = pnand %p142, %p143
      %p145 = pneg %p144
      // Predicated region
      $region9: #{tpu_custom_call.1} parent=5 // pred_check
        _
      $region10: #{tpu_custom_call.1} parent=5 // pred_check_branch
        %147 = sbr.rel (%p144) target = $region12
      $region11: #{tpu_custom_call.1} parent=5 // pred_region
        %s148 = ssub.s32 %s16, 1
        // Predicated region
        $region13: #{tpu_custom_call.1} parent=11 // pred_check
          %p149 = pneg %p80
        $region14: #{tpu_custom_call.1} parent=11 // pred_check_branch
          %151 = sbr.rel (%p149) target = $region16
        $region15: #{tpu_custom_call.1} parent=11 // pred_region
          %153 = vsyncadd [#allocation6], 0
          %s154 = smul.addr %s25, 4
          %s155 = scalar_lea.hbm %s1, %s154
          %s156 = sshll.u32 %s155, 4
          %s157 = int_to_ptr.hbm [resolvable:$true] %s156
          %s158 = sshll.u32 [#allocation5], 4
          %s159 = int_to_ptr.vmem [resolvable:$true] %s158
          %164 = dma.hbm_to_vmem [thread:$0]  %s157, 256, %s159, [#allocation6], 64, 64, 4
        $region16: #{tpu_custom_call.1} parent=11 // pred_fallthru
          _
        // Predicated region
        $region17: #{tpu_custom_call.1} parent=11 // pred_check
          %p165 = pneg %p106
        $region18: #{tpu_custom_call.1} parent=11 // pred_check_branch
          %167 = sbr.rel (%p165) target = $region20
        $region19: #{tpu_custom_call.1} parent=11 // pred_region
          %p168 = scmp.lt.s32.totalorder %s25, 0
          %s169 = scalar_select %p168, %s25, 0
          %s170 = scalar_lea.vmem %s2, %s169
        $region20: #{tpu_custom_call.1} parent=11 // pred_fallthru
          _
      $region12: #{tpu_custom_call.1} parent=5 // pred_fallthru
        _
      %p171 = scmp.lt.s32.totalorder %s16, 2
      // Predicated region
      $region21: #{tpu_custom_call.1} parent=5 // pred_check
        %p172 = pneg %p171
      $region22: #{tpu_custom_call.1} parent=5 // pred_check_branch
        %174 = sbr.rel (%p172) target = $region24
      $region23: #{tpu_custom_call.1} parent=5 // pred_region
        // Predicated region
        $region25: #{tpu_custom_call.1} parent=23 // pred_check
          %p175 = pneg %p48
        $region26: #{tpu_custom_call.1} parent=23 // pred_check_branch
          %177 = sbr.rel (%p175) target = $region28
        $region27: #{tpu_custom_call.1} parent=23 // pred_region
          %s178 = sand.u32 %s38, 1
          %s179 = scalar_lea.sflag [#allocation3], %s178
          %s180 = sand.u32 %s38, 1
          %s181 = smul.addr %s180, 8
          %s182 = scalar_lea.vmem [#allocation2], %s181
          %184 = vsyncadd %s179, 0
          %s185 = smul.addr %s24, 8
          %s186 = scalar_lea.hbm %s0, %s185
          %s188 = sshll.u32 %s186, 4
          %s189 = int_to_ptr.hbm [resolvable:$true] %s188
          %s190 = sshll.u32 %s182, 4
          %s191 = int_to_ptr.vmem [resolvable:$true] %s190
          %193 = dma.hbm_to_vmem [thread:$0]  %s189, 128, %s191, %s179
        $region28: #{tpu_custom_call.1} parent=23 // pred_fallthru
          _
      $region24: #{tpu_custom_call.1} parent=5 // pred_fallthru
        _
      %p194 = scmp.le.s32.totalorder 1, %s16
      %p195 = scmp.lt.s32.totalorder %s16, 3
      %p196 = pnand %p194, %p195
      %p197 = pneg %p196
      // Predicated region
      $region29: #{tpu_custom_call.1} parent=5 // pred_check
        _
      $region30: #{tpu_custom_call.1} parent=5 // pred_check_branch
        %199 = sbr.rel (%p196) target = $region32
      $region31: #{tpu_custom_call.1} parent=5 // pred_region
        %s200 = ssub.s32 %s16, 1
        %s201 = sand.u32 %s41, 1
        %s202 = scalar_lea.sflag [#allocation3], %s201
        %s203 = sand.u32 %s41, 1
        %s204 = smul.addr %s203, 8
        %s205 = scalar_lea.vmem [#allocation2], %s204
        // Predicated region
        $region33: #{tpu_custom_call.1} parent=31 // pred_check
          %p206 = pneg %p54
        $region34: #{tpu_custom_call.1} parent=31 // pred_check_branch
          %208 = sbr.rel (%p206) target = $region36
        $region35: #{tpu_custom_call.1} parent=31 // pred_region
          %210 = dma.done %s202, 128
        $region36: #{tpu_custom_call.1} parent=31 // pred_fallthru
          _
        // Predicated region
        $region37: #{tpu_custom_call.1} parent=31 // pred_check
          %p211 = pneg %p80
        $region38: #{tpu_custom_call.1} parent=31 // pred_check_branch
          %213 = sbr.rel (%p211) target = $region40
        $region39: #{tpu_custom_call.1} parent=31 // pred_region
          %215 = dma.done [#allocation6], 256
        $region40: #{tpu_custom_call.1} parent=31 // pred_fallthru
          _
        %s216 = sand.u32 %s41, 1
        %s217 = scalar_lea.sflag [#allocation3], %s216
        %s218 = sand.u32 %s41, 1
        %s219 = smul.addr %s218, 8
        %s220 = scalar_lea.vmem [#allocation2], %s219
        %p221 = pneg %p54
        %p222 = pneg %p51
        %p223 = pneg %p80
        %p224 = pneg %p77
        %p225 = scmp.lt.s32.totalorder %s25, 0
        %s226 = scalar_select %p225, %s25, 0
        %s227 = scalar_lea.vmem %s2, %s226
        %p228 = pneg %p106
        %p229 = pneg %p103
        %p230 = pneg %p134
        %p231 = pneg %p131
        %s232 = sand.u32 %s121, 1
        %s233 = scalar_lea.sflag [#allocation4], %s232
        %s234 = sand.u32 %s121, 1
        %s235 = smul.addr %s234, 8
        %s236 = scalar_lea.vmem [#allocation7], %s235
        %p237 = scmp.lt.s32.totalorder %s25, 0
        %s238 = scalar_select %p237, %s25, 0
        %s239 = scalar_lea.vmem %s2, %s238
        %v241 = vld [vmem:[%s205] sm:$0xff]
        %v242 = vpack.c.bf16 %v241, %v241
        %v243 = vld [vmem:[#allocation5] sm:$0xf]
        %v244 = vld [vmem:[#allocation5 + $0x4] sm:$0xf]
        %v245 = vld [vmem:[#allocation5 + $0x8] sm:$0xf]
        %v246 = vld [vmem:[#allocation5 + $0xc] sm:$0xf]
        %v247 = vld [vmem:[%s239] sm:$0x1]
        %v249 = vperm.slane %v247, 0
        %v255 = vunpack.c.l.b16 %v243
        %v256 = vunpack.c.l.b16 %v244
        %v257 = vunpack.c.l.b16 %v245
        %v258 = vunpack.c.l.b16 %v246
        %v259 = vpack.c.b16 %v256, %v255
        %v260 = vpack.c.b16 %v258, %v257
        %vm263 = vcmask 261120
        %v265 = vsel %vm263, %v242, 0
        %267 = vmatpush.bf16.msra.mxu0 0
        %268 = vmatpush.bf16.msra.mxu0 0
        %269 = vmatpush.bf16.msra.mxu0 0
        %270 = vmatpush.bf16.msra.mxu0 0
        %271 = vmatpush.bf16.msra.mxu0 0
        %272 = vmatpush.bf16.msra.mxu0 0
        %273 = vmatpush.bf16.msra.mxu0 %v260
        %274 = vmatpush.bf16.msra.mxu0 %v259
        %275 = vmatmul.bf16.gmra.mxu0 %v265
        %v276 = vpop.f32.mrf.mxu0
        %v277 = vadd.f32 %v249, %v276
        %v278 = vpop.f32.mrf.mxu0
        %279 = vdwg.mxu0
        %280 = vst [vmem:[%s236] sm:$0xff] %v277
        %s281 = sand.u32 %s121, 1
        %s282 = scalar_lea.sflag [#allocation4], %s281
        %s283 = sand.u32 %s121, 1
        %s284 = smul.addr %s283, 8
        %s285 = scalar_lea.vmem [#allocation7], %s284
        // Predicated region
        $region41: #{tpu_custom_call.1} parent=31 // pred_check
          %p286 = pneg %p131
        $region42: #{tpu_custom_call.1} parent=31 // pred_check_branch
          %288 = sbr.rel (%p286) target = $region44
        $region43: #{tpu_custom_call.1} parent=31 // pred_region
          %290 = vsyncadd %s282, 0
          %s291 = sadd.s32 %s25, %s26
          %s292 = smul.addr %s291, 8
          %s293 = scalar_lea.hbm %s3, %s292
          %s295 = sshll.u32 %s285, 4
          %s296 = int_to_ptr.vmem [resolvable:$true] %s295
          %s297 = sshll.u32 %s293, 4
          %s298 = int_to_ptr.hbm [resolvable:$true] %s297
          %300 = dma.vmem_to_hbm [thread:$0]  %s296, 128, %s298, %s282
        $region44: #{tpu_custom_call.1} parent=31 // pred_fallthru
          _
      $region32: #{tpu_custom_call.1} parent=5 // pred_fallthru
        _
      %p301 = scmp.le.s32.totalorder 2, %s16
      // Predicated region
      $region45: #{tpu_custom_call.1} parent=5 // pred_check
        %p302 = pneg %p301
      $region46: #{tpu_custom_call.1} parent=5 // pred_check_branch
        %304 = sbr.rel (%p302) target = $region48
      $region47: #{tpu_custom_call.1} parent=5 // pred_region
        %s305 = ssub.s32 %s16, 2
        // Predicated region
        $region49: #{tpu_custom_call.1} parent=47 // pred_check
          %p306 = pneg %p137
        $region50: #{tpu_custom_call.1} parent=47 // pred_check_branch
          %308 = sbr.rel (%p306) target = $region52
        $region51: #{tpu_custom_call.1} parent=47 // pred_region
          %s309 = sand.u32 %s122, 1
          %s310 = scalar_lea.sflag [#allocation4], %s309
          %s311 = sand.u32 %s122, 1
          %s312 = smul.addr %s311, 8
          %s313 = scalar_lea.vmem [#allocation7], %s312
          %315 = dma.done %s310, 128
        $region52: #{tpu_custom_call.1} parent=47 // pred_fallthru
          _
      $region48: #{tpu_custom_call.1} parent=5 // pred_fallthru
        _
    $region6: #{tpu_custom_call.1} parent=1 // loop_footer
      %s20 = sadd.s32 1, %s16
    $region7: #{tpu_custom_call.1} parent=1 // loop_footer_branch
      %15 = sbr.rel target = $region3
    $region8: #{tpu_custom_call.1} parent=1 // loop_exit
      _
    %316 = vsyncpa [#allocation3], 1
    %s317 = scalar_lea.sflag [#allocation3], 1
    %318 = vsyncpa %s317, 1
    %319 = vsyncpa [#allocation6], 1
    %320 = vsyncpa [#allocation4], 1
    %s321 = scalar_lea.sflag [#allocation4], 1
    %322 = vsyncpa %s321, 1

</llo_original>
